<compile_context>
chip_gen: v7x
topology: tpu7x:2x2x1
jax: 0.10.0
libtpu: 0.0.40
codegen_flags: <defaults>
</compile_context>

<pallas_src>
import functools

import jax
import jax.numpy as jnp
from jax.experimental import pallas as pl
from jax.experimental.pallas import tpu as pltpu


# ---------------------------------------------------------------------------
# Hardware-aware tile caps.
# ---------------------------------------------------------------------------
def _vmem_capacity_bytes():
    try:
        info = pltpu.get_tpu_info()
        cap = getattr(info, "vmem_capacity_bytes", None)
        if cap:
            return int(cap)
    except Exception:
        pass
    return 64 * 1024 * 1024  # conservative: assume a 64-MiB-VMEM part (v7x)


def _default_caps():
    """(row-tile cap, lane-tile cap, scoped-VMEM limit) for this generation."""
    if _vmem_capacity_bytes() >= 100 * 1024 * 1024:    # v5e / v6e: 128 MiB VMEM
        return 512, 4096, 96 * 1024 * 1024
    return 256, 4096, 48 * 1024 * 1024                 # v7x-class: 64 MiB VMEM


# ---------------------------------------------------------------------------
# Copy-free 2D views.
# ---------------------------------------------------------------------------
def _as_lane_dense_2d(x, tk_cap):
    """Copy-free 2D view of a contiguous array.

    Prefers a fully lane-aligned (rows, cols) factorization with cols a
    multiple of 128 (exists iff numel % 128 == 0); otherwise falls back to a
    full-extent / natural collapse handled by full-extent blocks or in-kernel
    masking.  Never pads, never copies.
    """
    n = x.size
    if n % 128 == 0:
        q = n // 128
        divisors = [m for m in range(1, min(tk_cap // 128, q) + 1) if q % m == 0]
        # Widest lane extent that still leaves >= 8 rows (full sublanes per
        # vreg); otherwise just the widest divisor.
        full_sublane = [m for m in divisors if n // (128 * m) >= 8]
        m = max(full_sublane) if full_sublane else max(divisors)
        cols = 128 * m
        return x.reshape(n // cols, cols)
    if n <= tk_cap:                       # one full-extent (1, n) block
        return x.reshape(1, n)
    if x.ndim >= 3:                       # natural collapse: lanes = H*W
        lead = 1
        for d in x.shape[:-2]:
            lead *= int(d)
        return x.reshape(lead, int(x.shape[-2]) * int(x.shape[-1]))
    if x.ndim == 2:
        return x
    return x.reshape(1, n)


# ---------------------------------------------------------------------------
# Kernels.
# ---------------------------------------------------------------------------
def _masked_sq(x_ref, t_ref, *, rows, cols, tm, tk, mask_rows, mask_cols):
    """f32 squared difference of the current tile; out-of-bounds rows / lanes
    of ragged edge tiles (whose contents are undefined) are forced to zero."""
    x = x_ref[...].astype(jnp.float32)
    t = t_ref[...].astype(jnp.float32)
    diff = x - t
    sq = diff * diff
    if mask_rows:
        r = jax.lax.broadcasted_iota(jnp.int32, (tm, 1), 0) + pl.program_id(0) * tm
        sq = jnp.where(r < rows, sq, 0.0)
    if mask_cols:
        c = jax.lax.broadcasted_iota(jnp.int32, (1, tk), 1) + pl.program_id(1) * tk
        sq = jnp.where(c < cols, sq, 0.0)
    return sq


def _sse_kernel_single(x_ref, t_ref, out_ref, **kw):
    # One column block per row block: reduce the tile straight to its partial.
    out_ref[...] = jnp.sum(_masked_sq(x_ref, t_ref, **kw)).reshape(1, 1, 1)


def _sse_kernel_multi(x_ref, t_ref, out_ref, acc_ref, **kw):
    # Several column blocks: accumulate with pure VALU adds into a VMEM scratch
    # tile (no per-step cross-lane reduce / scalar RMW); reduce once per row
    # block on the last column step.
    j = pl.program_id(1)
    sq = _masked_sq(x_ref, t_ref, **kw)

    @pl.when(j == 0)
    def _():
        acc_ref[...] = sq

    @pl.when(j > 0)
    def _():
        acc_ref[...] += sq

    @pl.when(j == pl.num_programs(1) - 1)
    def _():
        out_ref[...] = jnp.sum(acc_ref[...]).reshape(1, 1, 1)


# ---------------------------------------------------------------------------
# Wrapper.
# ---------------------------------------------------------------------------
@functools.partial(jax.jit, static_argnames=("tm_cap", "tk_cap"))
def content_loss_pallas(x, target, *, tm_cap=None, tk_cap=None):
    """loss = mean((x - target)^2) over all elements.  Returns (x, loss)."""
    assert x.shape == target.shape, (x.shape, target.shape)
    cap_m, cap_k, vmem_limit = _default_caps()
    tm_cap = cap_m if tm_cap is None else tm_cap
    tk_cap = cap_k if tk_cap is None else tk_cap

    n = x.size
    x2 = _as_lane_dense_2d(x, tk_cap)
    t2 = _as_lane_dense_2d(target, tk_cap)
    rows, cols = x2.shape

    # Full-extent block when a dim fits its cap (no masking, (8,128) rule
    # waived); otherwise an aligned tile with in-kernel masking of the ragged
    # edge block.  No jnp.pad -> no extra HBM traffic on either operand.
    tm = rows if rows <= tm_cap else tm_cap     # tm_cap is a multiple of 8
    tk = cols if cols <= tk_cap else tk_cap     # tk_cap is a multiple of 128
    n_m = pl.cdiv(rows, tm)
    n_k = pl.cdiv(cols, tk)

    kw = dict(rows=rows, cols=cols, tm=tm, tk=tk,
              mask_rows=(rows % tm) != 0, mask_cols=(cols % tk) != 0)
    if n_k == 1:
        kernel = functools.partial(_sse_kernel_single, **kw)
        scratch = []
    else:
        kernel = functools.partial(_sse_kernel_multi, **kw)
        scratch = [pltpu.VMEM((tm, tk), jnp.float32)]

    bytes_in = n * (jnp.dtype(x.dtype).itemsize + jnp.dtype(target.dtype).itemsize)
    cost = pl.CostEstimate(flops=3 * n, transcendentals=0,
                           bytes_accessed=bytes_in + n_m * 4)

    partials = pl.pallas_call(
        kernel,
        out_shape=jax.ShapeDtypeStruct((n_m, 1, 1), jnp.float32),
        grid_spec=pltpu.PrefetchScalarGridSpec(
            num_scalar_prefetch=0,
            grid=(n_m, n_k),
            in_specs=[
                pl.BlockSpec((tm, tk), lambda i, j: (i, j)),
                pl.BlockSpec((tm, tk), lambda i, j: (i, j)),
            ],
            out_specs=pl.BlockSpec((1, 1, 1), lambda i, j: (i, 0, 0)),
            scratch_shapes=scratch,
        ),
        compiler_params=pltpu.CompilerParams(
            # Row blocks are independent (each owns its own output element), so
            # the row axis can be sharded across TensorCores on v7x; the
            # reduction (column) axis stays innermost / arbitrary.
            dimension_semantics=("parallel", "arbitrary"),
            vmem_limit_bytes=vmem_limit,
        ),
        cost_estimate=cost,
    )(x2, t2)

    loss = jnp.sum(partials) * (1.0 / float(n))
    return x, loss


class ContentLossPallas:
    """Mirror of the PyTorch ContentLoss module (forward pass only)."""

    def __init__(self, target):
        self.target = jax.lax.stop_gradient(jnp.asarray(target))  # .detach()
        self.loss = None

    def __call__(self, x):
        out, loss = content_loss_pallas(x, self.target)
        self.loss = loss
        return out


if __name__ == "__main__":
    key = jax.random.PRNGKey(0)

    def run_case(shape, *, idx, **caps):
        k1, k2 = jax.random.split(jax.random.fold_in(key, idx))
        target = jax.random.normal(k1, shape, dtype=jnp.float32)
        x = jax.random.normal(k2, shape, dtype=jnp.float32)

        module = ContentLossPallas(target)
        if caps:
            out, loss = content_loss_pallas(x, module.target, **caps)
        else:
            out = module(x)
            loss = module.loss
        out = jax.block_until_ready(out)
        loss = jax.block_until_ready(loss)

        loss_ref = jnp.mean((x - target) ** 2)
        assert jnp.allclose(out, x), "ContentLoss must return its input unchanged"
        assert jnp.allclose(loss, loss_ref, rtol=1e-5, atol=1e-6), (
            shape, caps, loss, loss_ref)

    # Typical NCHW content-feature map (batch=2, channels=4, 16x16): 128-aligned
    # numel -> lane-dense (8, 256) view, single full-extent block, no masking.
    run_case((2, 4, 16, 16), idx=0)
    # Unaligned numel (600): full-extent (1, 600) block, no padding, no masking.
    run_case((2, 3, 10, 10), idx=1)
    # Larger map: lane-dense (12, 4096) view, single full-extent block.
    run_case((1, 16, 48, 64), idx=2)
    # Force several row blocks + ragged row edge (exercises the 'parallel' row
    # axis, in-kernel row masking and per-row-block partial outputs).
    run_case((1, 16, 48, 64), idx=3, tm_cap=32, tk_cap=1024)
    # Force several column blocks + ragged lane edge (exercises the VMEM
    # scratch accumulator path and in-kernel lane masking).
    run_case((4, 300), idx=4, tm_cap=256, tk_cap=128)

    print("KERNEL_OK")
</pallas_src>

<mosaic_0001>
module attributes {stable_mosaic.version = 11 : i64} {
  func.func @_sse_kernel_single(%arg0: i32, %arg1: i32, %arg2: memref<8x256xf32, #tpu.memory_space<vmem>>, %arg3: memref<8x256xf32, #tpu.memory_space<vmem>>, %arg4: memref<1x1x1xf32, #tpu.memory_space<vmem>>) attributes {dimension_semantics = [#tpu.dimension_semantics<parallel>, #tpu.dimension_semantics<arbitrary>], iteration_bounds = array<i64: 1, 1>, scalar_prefetch = 0 : i64, scratch_operands = 0 : i64, tpu.core_type = #tpu.core_type<tc>, window_params = [{transform_indices = @transform_0, window_bounds = array<i64: 8, 256>}, {transform_indices = @transform_1, window_bounds = array<i64: 8, 256>}, {transform_indices = @transform_2, window_bounds = array<i64: 1, 1, 1>}]} {
    %c0 = arith.constant 0 : index
    %c0_0 = arith.constant 0 : index
    %0 = vector.load %arg2[%c0, %c0_0] : memref<8x256xf32, #tpu.memory_space<vmem>>, vector<8x256xf32>
    %c0_1 = arith.constant 0 : index
    %c0_2 = arith.constant 0 : index
    %1 = vector.load %arg3[%c0_1, %c0_2] : memref<8x256xf32, #tpu.memory_space<vmem>>, vector<8x256xf32>
    %2 = arith.subf %0, %1 : vector<8x256xf32>
    %3 = arith.mulf %2, %2 : vector<8x256xf32>
    %4 = vector.shape_cast %3 : vector<8x256xf32> to vector<1x8x256xf32>
    %cst = arith.constant dense<0.000000e+00> : vector<1xf32>
    %5 = vector.multi_reduction <add>, %4, %cst [1, 2] : vector<1x8x256xf32> to vector<1xf32>
    %6 = vector.shape_cast %5 : vector<1xf32> to vector<1x1x1xf32>
    %7 = vector.extract %6[0, 0, 0] : f32 from vector<1x1x1xf32>
    %8 = vector.broadcast %7 : f32 to vector<1x1x1xf32>
    %c0_3 = arith.constant 0 : index
    %c0_4 = arith.constant 0 : index
    %c0_5 = arith.constant 0 : index
    %9 = vector.load %arg4[%c0_3, %c0_4, %c0_5] : memref<1x1x1xf32, #tpu.memory_space<vmem>>, vector<1x1x1xf32>
    tpu.vector_store %arg4[%c0_3, %c0_4, %c0_5], %8 {strides = array<i32>} : memref<1x1x1xf32, #tpu.memory_space<vmem>>, vector<1x1x1xf32>,
    return
  }
  func.func @transform_0(%arg0: i32, %arg1: i32) -> (i32, i32) {
    %c0_i32 = arith.constant 0 : i32
    return %arg0, %arg1 : i32, i32
  }
  func.func @transform_1(%arg0: i32, %arg1: i32) -> (i32, i32) {
    %c0_i32 = arith.constant 0 : i32
    return %arg0, %arg1 : i32, i32
  }
  func.func @transform_2(%arg0: i32, %arg1: i32) -> (i32, i32, i32) {
    %c0_i32 = arith.constant 0 : i32
    %c0_i32_0 = arith.constant 0 : i32
    %c0_i32_1 = arith.constant 0 : i32
    return %arg0, %c0_i32, %c0_i32_0 : i32, i32, i32
  }
}

</mosaic_0001>

<llo_original>
// kernel: content_loss_pallas.1
$region0: #{content_loss_pallas.1}
  #allocation0 [shape = 'u32[]', space=smem, size = 0x4, offset = 0x4, fixed_abs, tag = 'smem constant byte address 0x4 - core index']
  #allocation1 [shape = 'u32[144,128]{1,0:T(1,128)}', space=vmem, size = 0x12000, scoped, tag = 'internal scratch']
  %s0 = inlined_call_operand.vmem [shape: f32[8,256], index: 0, kind: input, shape index: {}]
  %s1 = inlined_call_operand.vmem [shape: f32[8,256], index: 1, kind: input, shape index: {}]
  %s2 = inlined_call_operand.hbm [shape: f32[1,1,1], index: 2, kind: output, shape index: {}]
  %s3 = sld [smem:[#allocation0]]
  $region18: #{content_loss_pallas.1} parent=0
    _
  %s5 = ssub.s32 1, %s3
  %s6 = scalar_select 0, %s5, %s3
  $region1: #{content_loss_pallas.1} parent=0
    #allocation2 [shape = 'u8[512]{0}', space=vmem, size = 0x400, scoped, tag = 'output window, operand 0, single buffered']
    #allocation3 [shape = 's32[1]{0}', space=sflag, size = 0x4, scoped, tag = 'scoped memory for content_loss_pallas.1']
    %7 = vsyncpa [#allocation3], 0
    // Predicated region
    $region2: #{content_loss_pallas.1} parent=1 // pred_check
      _
    $region3: #{content_loss_pallas.1} parent=1 // pred_check_branch
      %9 = sbr.rel (0) target = $region5
    $region4: #{content_loss_pallas.1} parent=1 // pred_region
      _
    $region5: #{content_loss_pallas.1} parent=1 // pred_fallthru
      _
    // Predicated region
    $region6: #{content_loss_pallas.1} parent=1 // pred_check
      _
    $region7: #{content_loss_pallas.1} parent=1 // pred_check_branch
      %11 = sbr.rel (0) target = $region9
    $region8: #{content_loss_pallas.1} parent=1 // pred_region
      _
    $region9: #{content_loss_pallas.1} parent=1 // pred_fallthru
      _
    %v12 = vld [vmem:[%s0] sm:$0xff]
    %v13 = vld [vmem:[%s0 + $0x8] sm:$0xff]
    %v14 = vld [vmem:[%s1] sm:$0xff]
    %v15 = vld [vmem:[%s1 + $0x8] sm:$0xff]
    %v16 = vsub.f32 %v12, %v14
    %v17 = vsub.f32 %v13, %v15
    %v18 = vmul.f32 %v16, %v16
    %v19 = vmul.f32 %v17, %v17
    %v20 = vadd.f32 %v18, %v19
    %21 = vadd.xlane.f32.xlu0 %v20
    %v22 = vpop.xlane.xlu0 %21
    %v23 = vrot.slane %v22, 4
    %v24 = vadd.f32 %v22, %v23
    %v25 = vrot.slane %v24, 2
    %v26 = vadd.f32 %v24, %v25
    %v27 = vrot.slane %v26, 1
    %v28 = vadd.f32 %v26, %v27
    %s29 = vtos %v28
    %v30 = vstv %s29
    %vm31 = vcmask 0
    %32 = vst.msk [vmem:[#allocation2] sm:$0x1] %vm31, %v30
    // Predicated region
    $region10: #{content_loss_pallas.1} parent=1 // pred_check
      _
    $region11: #{content_loss_pallas.1} parent=1 // pred_check_branch
      %34 = sbr.rel (0) target = $region13
    $region12: #{content_loss_pallas.1} parent=1 // pred_region
      %s36 = ssub.s32 16, 16
      %37 = vsyncadd [#allocation3], %s36
      %s39 = sshll.u32 [#allocation2], 4
      %s40 = int_to_ptr.vmem [resolvable:$true] %s39
      %42 = dma.vmem_to_hbm [thread:$0]  %s40, 16, %s2, [#allocation3]
    $region13: #{content_loss_pallas.1} parent=1 // pred_fallthru
      _
    // Predicated region
    $region14: #{content_loss_pallas.1} parent=1 // pred_check
      _
    $region15: #{content_loss_pallas.1} parent=1 // pred_check_branch
      %44 = sbr.rel (0) target = $region17
    $region16: #{content_loss_pallas.1} parent=1 // pred_region
      %45 = dma.done [#allocation3], 16
    $region17: #{content_loss_pallas.1} parent=1 // pred_fallthru
      _
    %46 = vsyncpa [#allocation3], 1

</llo_original>
